<compile_context>
chip_gen: v5e
topology: v5e:2x2
jax: 0.10.0
libtpu: 0.0.40
codegen_flags: <defaults>
</compile_context>

<pallas_src>
import functools
import math

import jax
import jax.numpy as jnp
from jax.experimental import pallas as pl
from jax.experimental.pallas import tpu as pltpu

BN_EPS = 1e-5
LANE = 128
SUBLANE = 8


def _round_up(x, m):
    return (x + m - 1) // m * m


# ---------------- Pass 1: conv matmul + per-channel sum / sum-of-squares ----------
def _stats_kernel(x_ref, w_ref, sum_ref, sq_ref):
    r = pl.program_id(1)

    @pl.when(r == 0)
    def _():
        sum_ref[...] = jnp.zeros_like(sum_ref)
        sq_ref[...] = jnp.zeros_like(sq_ref)

    # (rows, 3*Cin_p) @ (3*Cin_p, Cout_p) -> f32 conv tile.  Zero-padded rows /
    # channels contribute exactly 0 to both sums, so they never corrupt the stats.
    conv = jnp.dot(x_ref[0], w_ref[0], preferred_element_type=jnp.float32)
    sum_ref[...] += jnp.sum(conv, axis=0, keepdims=True)[None]
    sq_ref[...] += jnp.sum(conv * conv, axis=0, keepdims=True)[None]


# ---------------- Pass 2: conv + BN affine + ReLU + skip ---------------------------
def _apply_kernel(x_ref, w_ref, scale_ref, shift_ref, out_ref, *, cout_p, cin_p,
                  has_skip):
    x = x_ref[0]                                                    # (rows, 3*Cin_p)
    acc = jnp.dot(x, w_ref[0], preferred_element_type=jnp.float32)  # one fat matmul
    conv = acc[:, :cout_p]
    y = jnp.maximum(conv * scale_ref[0] + shift_ref[0], 0.0)
    if has_skip:
        skip = acc[:, cout_p:]          # skip conv fused as extra matmul columns
    else:
        # input_size == output_size -> identity residual: just add the center tap.
        skip = x[:, cin_p:2 * cin_p].astype(jnp.float32)
    out_ref[0] = (y + skip).astype(out_ref.dtype)


def mmcnn_encoder_layer(xa_ncw, xv_ncw, params, *, row_tile=512,
                        matmul_dtype=jnp.bfloat16):
    """xa_ncw, xv_ncw: (B, Cin, T) float32 (PyTorch NCW). Returns (B, Cout, T) pair."""
    B, Cin, T = xa_ncw.shape
    Cout = params["a_w"].shape[-1]
    has_skip = params.get("a_skip", None) is not None

    cin_p = _round_up(Cin, LANE)
    cout_p = _round_up(Cout, LANE)
    R = B * T
    tr = _round_up(min(row_tile, _round_up(R, SUBLANE)), SUBLANE)
    Rp = _round_up(R, tr)
    n_row = Rp // tr
    grid = (2, n_row)        # (branch, row-tile): branch axis is megacore-parallel

    # ---- im2col in the wrapper (HBM, plain XLA): zero T-padding handled here so the
    # ---- kernel sees one contiguous (rows, 3*Cin_p) slab and needs no in-kernel pad.
    def im2col(x_ncw):
        x = jnp.transpose(x_ncw, (0, 2, 1)).astype(jnp.float32)        # (B, T, Cin)
        x = jnp.pad(x, ((0, 0), (0, 0), (0, cin_p - Cin)))
        xp = jnp.pad(x, ((0, 0), (1, 1), (0, 0)))                      # (B, T+2, Cin_p)
        cols = jnp.concatenate([xp[:, 0:T], xp[:, 1:T + 1], xp[:, 2:T + 2]],
                               axis=-1)                                # (B, T, 3*Cin_p)
        cols = cols.reshape(R, 3 * cin_p)
        cols = jnp.pad(cols, ((0, Rp - R), (0, 0)))
        return cols.astype(matmul_dtype)

    x_st = jnp.stack([im2col(xa_ncw), im2col(xv_ncw)])                 # (2, Rp, 3Cin_p)

    def conv_w(w):  # (3, Cin, Cout) -> (3*Cin_p, Cout_p)
        wp = jnp.pad(w, ((0, 0), (0, cin_p - Cin), (0, cout_p - Cout)))
        return wp.reshape(3 * cin_p, cout_p)

    w1a, w1v = conv_w(params["a_w"]), conv_w(params["v_w"])
    w1_st = jnp.stack([w1a, w1v]).astype(matmul_dtype)                 # (2, 3Cin_p, Cout_p)

    if has_skip:
        def fused_w(wc, ws):
            wsp = jnp.pad(ws, ((0, cin_p - Cin), (0, cout_p - Cout)))
            big = jnp.zeros((3 * cin_p, cout_p), jnp.float32)
            big = big.at[cin_p:2 * cin_p].set(wsp)   # skip acts on the center tap only
            return jnp.concatenate([wc, big], axis=1)                  # (3Cin_p, 2Cout_p)
        w2_st = jnp.stack([fused_w(w1a, params["a_skip"]),
                           fused_w(w1v, params["v_skip"])]).astype(matmul_dtype)
        w2_cols = 2 * cout_p
    else:
        w2_st = w1_st
        w2_cols = cout_p

    x_spec = pl.BlockSpec((1, tr, 3 * cin_p), lambda b, r: (b, r, 0))
    ch_spec = pl.BlockSpec((1, 1, cout_p), lambda b, r: (b, 0, 0))

    # ---------------- Pass 1: batch statistics ----------------
    sums, sqs = pl.pallas_call(
        _stats_kernel,
        grid=grid,
        in_specs=[x_spec,
                  pl.BlockSpec((1, 3 * cin_p, cout_p), lambda b, r: (b, 0, 0))],
        out_specs=(ch_spec, ch_spec),
        out_shape=(jax.ShapeDtypeStruct((2, 1, cout_p), jnp.float32),
                   jax.ShapeDtypeStruct((2, 1, cout_p), jnp.float32)),
        compiler_params=pltpu.CompilerParams(
            dimension_semantics=("parallel", "arbitrary"),
            vmem_limit_bytes=32 * 1024 * 1024),
    )(x_st, w1_st)

    # ---- Finalize BN affine (tiny per-channel math, plain XLA, f32). ----
    def pad_ch(v, fill):
        return jnp.pad(v.reshape(-1).astype(jnp.float32), (0, cout_p - Cout),
                       constant_values=fill)
    gamma = jnp.stack([pad_ch(params["a_gamma"], 1.0), pad_ch(params["v_gamma"], 1.0)])
    beta = jnp.stack([pad_ch(params["a_beta"], 0.0), pad_ch(params["v_beta"], 0.0)])
    n = jnp.float32(R)
    mean = sums[:, 0] / n                                              # (2, Cout_p)
    var = jnp.maximum(sqs[:, 0] / n - mean * mean, 0.0)
    scale = gamma * jax.lax.rsqrt(var + BN_EPS)
    shift = beta - mean * scale
    scale = scale[:, None, :]                                          # (2, 1, Cout_p)
    shift = shift[:, None, :]

    # ---------------- Pass 2: normalize + ReLU + skip, lane-dense stores ----------------
    kernel2 = functools.partial(_apply_kernel, cout_p=cout_p, cin_p=cin_p,
                                has_skip=has_skip)
    out = pl.pallas_call(
        kernel2,
        grid=grid,
        in_specs=[x_spec,
                  pl.BlockSpec((1, 3 * cin_p, w2_cols), lambda b, r: (b, 0, 0)),
                  ch_spec, ch_spec],
        out_specs=pl.BlockSpec((1, tr, cout_p), lambda b, r: (b, r, 0)),
        out_shape=jax.ShapeDtypeStruct((2, Rp, cout_p), jnp.float32),
        compiler_params=pltpu.CompilerParams(
            dimension_semantics=("parallel", "parallel"),
            vmem_limit_bytes=32 * 1024 * 1024),
    )(x_st, w2_st, scale, shift)

    out = out[:, :R, :Cout].reshape(2, B, T, Cout)
    a_out = jnp.transpose(out[0], (0, 2, 1))
    v_out = jnp.transpose(out[1], (0, 2, 1))
    return a_out, v_out


def init_params(key, input_size, output_size):
    """Deterministic parameter init mirroring the module's __init__ shapes."""
    k1, k2, k3, k4 = jax.random.split(key, 4)
    K = 3
    bound = math.sqrt(6.0 / (input_size * K + output_size * K))   # xavier_uniform_
    a_w_t = jax.random.uniform(k1, (output_size, input_size, K), jnp.float32, -bound, bound)
    v_w_t = jax.random.uniform(k2, (output_size, input_size, K), jnp.float32, -bound, bound)
    params = {
        "a_w": jnp.transpose(a_w_t, (2, 1, 0)),   # (K, Cin, Cout)
        "v_w": jnp.transpose(v_w_t, (2, 1, 0)),
        "a_gamma": jnp.ones((output_size,), jnp.float32),
        "a_beta": jnp.zeros((output_size,), jnp.float32),
        "v_gamma": jnp.ones((output_size,), jnp.float32),
        "v_beta": jnp.zeros((output_size,), jnp.float32),
    }
    if input_size != output_size:
        sbound = 1.0 / math.sqrt(input_size)      # PyTorch default Conv1d 1x1 init
        a_s = jax.random.uniform(k3, (output_size, input_size, 1), jnp.float32, -sbound, sbound)
        v_s = jax.random.uniform(k4, (output_size, input_size, 1), jnp.float32, -sbound, sbound)
        params["a_skip"] = jnp.transpose(a_s[..., 0], (1, 0))     # (Cin, Cout)
        params["v_skip"] = jnp.transpose(v_s[..., 0], (1, 0))
    else:
        params["a_skip"] = None                                   # identity residual
        params["v_skip"] = None
    return params


def reference(xa_ncw, xv_ncw, params):
    """Plain-JAX f32 reference for numerical sanity checking."""
    def branch(x_ncw, w, gamma, beta, skip_w):
        x = jnp.transpose(x_ncw, (0, 2, 1)).astype(jnp.float32)
        _, T, _ = x.shape
        xp = jnp.pad(x, ((0, 0), (1, 1), (0, 0)))
        acc = sum(jnp.einsum('btc,co->bto', xp[:, k:k + T, :], w[k]) for k in range(3))
        mean = jnp.mean(acc, axis=(0, 1), keepdims=True)
        var = jnp.mean((acc - mean) ** 2, axis=(0, 1), keepdims=True)
        y = (acc - mean) * jax.lax.rsqrt(var + BN_EPS) * gamma.reshape(1, 1, -1) \
            + beta.reshape(1, 1, -1)
        y = jnp.maximum(y, 0.0)
        skip = x if skip_w is None else jnp.einsum('btc,co->bto', x, skip_w)
        return jnp.transpose(y + skip, (0, 2, 1))
    a = branch(xa_ncw, params["a_w"], params["a_gamma"], params["a_beta"], params["a_skip"])
    v = branch(xv_ncw, params["v_w"], params["v_gamma"], params["v_beta"], params["v_skip"])
    return a, v


if __name__ == "__main__":
    key = jax.random.PRNGKey(0)
    kx, ky, kp, kq = jax.random.split(key, 4)

    # Case 1: input_size != output_size -> 1x1 skip convs present (fused matmul path).
    B, Cin, Cout, T = 2, 24, 48, 200     # R = 400 rows -> 4 row tiles of 128
    xa = jax.random.normal(kx, (B, Cin, T), jnp.float32)
    xv = jax.random.normal(ky, (B, Cin, T), jnp.float32)
    params = init_params(kp, Cin, Cout)

    a_out, v_out = mmcnn_encoder_layer(xa, xv, params, row_tile=128)
    jax.block_until_ready((a_out, v_out))
    a_ref, v_ref = reference(xa, xv, params)
    assert a_out.shape == (B, Cout, T) and v_out.shape == (B, Cout, T)
    # bf16 matmul inputs -> slightly looser tolerance (BN math itself stays f32).
    assert jnp.allclose(a_out, a_ref, atol=3e-2, rtol=3e-2)
    assert jnp.allclose(v_out, v_ref, atol=3e-2, rtol=3e-2)

    # Case 2: input_size == output_size -> identity residual (no skip matmul at all).
    params2 = init_params(kq, Cout, Cout)
    xb = jax.random.normal(kx, (B, Cout, T), jnp.float32)
    xc = jax.random.normal(ky, (B, Cout, T), jnp.float32)
    b_out, c_out = mmcnn_encoder_layer(xb, xc, params2, row_tile=128)
    jax.block_until_ready((b_out, c_out))
    b_ref, c_ref = reference(xb, xc, params2)
    assert jnp.allclose(b_out, b_ref, atol=3e-2, rtol=3e-2)
    assert jnp.allclose(c_out, c_ref, atol=3e-2, rtol=3e-2)

    print("KERNEL_OK")
</pallas_src>

<mosaic_0001>
module attributes {stable_mosaic.version = 11 : i64} {
  func.func @_stats_kernel(%arg0: i32, %arg1: i32, %arg2: memref<1x128x384xbf16, #tpu.memory_space<vmem>>, %arg3: memref<1x384x128xbf16, #tpu.memory_space<vmem>>, %arg4: memref<1x1x128xf32, #tpu.memory_space<vmem>>, %arg5: memref<1x1x128xf32, #tpu.memory_space<vmem>>) attributes {dimension_semantics = [#tpu.dimension_semantics<parallel>, #tpu.dimension_semantics<arbitrary>], iteration_bounds = array<i64: 2, 4>, scalar_prefetch = 0 : i64, scratch_operands = 0 : i64, tpu.core_type = #tpu.core_type<tc>, window_params = [{transform_indices = @transform_0, window_bounds = array<i64: 1, 128, 384>}, {transform_indices = @transform_1, window_bounds = array<i64: 1, 384, 128>}, {transform_indices = @transform_2, window_bounds = array<i64: 1, 1, 128>}, {transform_indices = @transform_3, window_bounds = array<i64: 1, 1, 128>}]} {
    %c0_i32 = arith.constant 0 : i32
    %0 = arith.cmpi eq, %arg1, %c0_i32 : i32
    %1 = arith.extui %0 : i1 to i32
    %c0_i32_0 = arith.constant 0 : i32
    %2 = arith.cmpi ne, %1, %c0_i32_0 : i32
    scf.if %2 {
      %cst_20 = arith.constant 0.000000e+00 : f32
      %21 = vector.broadcast %cst_20 : f32 to vector<1x1x128xf32>
      %c0_21 = arith.constant 0 : index
      %c0_22 = arith.constant 0 : index
      %c0_23 = arith.constant 0 : index
      %22 = vector.load %arg4[%c0_21, %c0_22, %c0_23] : memref<1x1x128xf32, #tpu.memory_space<vmem>>, vector<1x1x128xf32>
      tpu.vector_store %arg4[%c0_21, %c0_22, %c0_23], %21 {strides = array<i32>} : memref<1x1x128xf32, #tpu.memory_space<vmem>>, vector<1x1x128xf32>,
      %cst_24 = arith.constant 0.000000e+00 : f32
      %23 = vector.broadcast %cst_24 : f32 to vector<1x1x128xf32>
      %c0_25 = arith.constant 0 : index
      %c0_26 = arith.constant 0 : index
      %c0_27 = arith.constant 0 : index
      %24 = vector.load %arg5[%c0_25, %c0_26, %c0_27] : memref<1x1x128xf32, #tpu.memory_space<vmem>>, vector<1x1x128xf32>
      tpu.vector_store %arg5[%c0_25, %c0_26, %c0_27], %23 {strides = array<i32>} : memref<1x1x128xf32, #tpu.memory_space<vmem>>, vector<1x1x128xf32>,
    } else {
    }
    %c0 = arith.constant 0 : index
    %c0_1 = arith.constant 0 : index
    %c0_2 = arith.constant 0 : index
    %3 = vector.load %arg2[%c0, %c0_1, %c0_2] : memref<1x128x384xbf16, #tpu.memory_space<vmem>>, vector<1x128x384xbf16>
    %4 = vector.shape_cast %3 : vector<1x128x384xbf16> to vector<128x384xbf16>
    %c0_3 = arith.constant 0 : index
    %c0_4 = arith.constant 0 : index
    %c0_5 = arith.constant 0 : index
    %5 = vector.load %arg3[%c0_3, %c0_4, %c0_5] : memref<1x384x128xbf16, #tpu.memory_space<vmem>>, vector<1x384x128xbf16>
    %6 = vector.shape_cast %5 : vector<1x384x128xbf16> to vector<384x128xbf16>
    %cst = arith.constant dense<0.000000e+00> : vector<128x128xf32>
    %7 = tpu.matmul %4, %6, %cst {dimension_numbers = #tpu.dot_dimension_numbers<[1], [0], [0], [1], [0, 0, 1, 1], [], []>} : vector<128x384xbf16>, vector<384x128xbf16>, vector<128x128xf32> -> vector<128x128xf32>
    %c0_6 = arith.constant 0 : index
    %c0_7 = arith.constant 0 : index
    %c0_8 = arith.constant 0 : index
    %8 = vector.load %arg4[%c0_6, %c0_7, %c0_8] : memref<1x1x128xf32, #tpu.memory_space<vmem>>, vector<1x1x128xf32>
    %cst_9 = arith.constant dense<0.000000e+00> : vector<128xf32>
    %9 = vector.multi_reduction <add>, %7, %cst_9 [0] : vector<128x128xf32> to vector<128xf32>
    %10 = vector.shape_cast %9 : vector<128xf32> to vector<1x128xf32>
    %11 = vector.shape_cast %10 : vector<1x128xf32> to vector<1x1x128xf32>
    %12 = arith.addf %8, %11 : vector<1x1x128xf32>
    %c0_10 = arith.constant 0 : index
    %c0_11 = arith.constant 0 : index
    %c0_12 = arith.constant 0 : index
    %13 = vector.load %arg4[%c0_10, %c0_11, %c0_12] : memref<1x1x128xf32, #tpu.memory_space<vmem>>, vector<1x1x128xf32>
    tpu.vector_store %arg4[%c0_10, %c0_11, %c0_12], %12 {strides = array<i32>} : memref<1x1x128xf32, #tpu.memory_space<vmem>>, vector<1x1x128xf32>,
    %c0_13 = arith.constant 0 : index
    %c0_14 = arith.constant 0 : index
    %c0_15 = arith.constant 0 : index
    %14 = vector.load %arg5[%c0_13, %c0_14, %c0_15] : memref<1x1x128xf32, #tpu.memory_space<vmem>>, vector<1x1x128xf32>
    %15 = arith.mulf %7, %7 : vector<128x128xf32>
    %cst_16 = arith.constant dense<0.000000e+00> : vector<128xf32>
    %16 = vector.multi_reduction <add>, %15, %cst_16 [0] : vector<128x128xf32> to vector<128xf32>
    %17 = vector.shape_cast %16 : vector<128xf32> to vector<1x128xf32>
    %18 = vector.shape_cast %17 : vector<1x128xf32> to vector<1x1x128xf32>
    %19 = arith.addf %14, %18 : vector<1x1x128xf32>
    %c0_17 = arith.constant 0 : index
    %c0_18 = arith.constant 0 : index
    %c0_19 = arith.constant 0 : index
    %20 = vector.load %arg5[%c0_17, %c0_18, %c0_19] : memref<1x1x128xf32, #tpu.memory_space<vmem>>, vector<1x1x128xf32>
    tpu.vector_store %arg5[%c0_17, %c0_18, %c0_19], %19 {strides = array<i32>} : memref<1x1x128xf32, #tpu.memory_space<vmem>>, vector<1x1x128xf32>,
    return
  }
  func.func @transform_0(%arg0: i32, %arg1: i32) -> (i32, i32, i32) {
    %c0_i32 = arith.constant 0 : i32
    %c0_i32_0 = arith.constant 0 : i32
    return %arg0, %arg1, %c0_i32 : i32, i32, i32
  }
  func.func @transform_1(%arg0: i32, %arg1: i32) -> (i32, i32, i32) {
    %c0_i32 = arith.constant 0 : i32
    %c0_i32_0 = arith.constant 0 : i32
    %c0_i32_1 = arith.constant 0 : i32
    return %arg0, %c0_i32, %c0_i32_0 : i32, i32, i32
  }
  func.func @transform_2(%arg0: i32, %arg1: i32) -> (i32, i32, i32) {
    %c0_i32 = arith.constant 0 : i32
    %c0_i32_0 = arith.constant 0 : i32
    %c0_i32_1 = arith.constant 0 : i32
    return %arg0, %c0_i32, %c0_i32_0 : i32, i32, i32
  }
  func.func @transform_3(%arg0: i32, %arg1: i32) -> (i32, i32, i32) {
    %c0_i32 = arith.constant 0 : i32
    %c0_i32_0 = arith.constant 0 : i32
    %c0_i32_1 = arith.constant 0 : i32
    return %arg0, %c0_i32, %c0_i32_0 : i32, i32, i32
  }
}

</mosaic_0001>

<llo_original>
// kernel: tpu_custom_call.1
$region0: #{tpu_custom_call.1}
  #allocation0 [shape = 'u32[]', space=smem, size = 0x4, offset = 0x4, fixed_abs, tag = 'smem constant byte address 0x4 - core index']
  #allocation1 [shape = 'u32[72,128]{1,0:T(1,128)}', space=vmem, size = 0x9000, scoped, tag = 'internal scratch']
  %s0 = inlined_call_operand.hbm [shape: bf16[2,512,384], index: 0, kind: input, shape index: {}]
  %s1 = inlined_call_operand.hbm [shape: bf16[2,384,128], index: 1, kind: input, shape index: {}]
  %s2 = inlined_call_operand.hbm [shape: f32[2,1,128], index: 2, kind: output, shape index: {0}]
  %s3 = inlined_call_operand.hbm [shape: f32[2,1,128], index: 3, kind: output, shape index: {1}]
  %4 = xla_tuple %s2, %s3
  %s5 = sld [smem:[#allocation0]]
  $region61: #{tpu_custom_call.1} parent=0
    _
  %s7 = ssub.s32 1, %s5
  %s8 = scalar_select 0, %s7, %s5
  $region1: #{tpu_custom_call.1} parent=0
    #allocation2 [shape = 'u8[196608]{0}', space=vmem, size = 0x30000, scoped, tag = 'input window, operand 0']
    #allocation3 [shape = 's32[2]{0}', space=sflag, size = 0x8, scoped, tag = 'scoped memory for tpu_custom_call.1']
    #allocation4 [shape = 's32[2]{0}', space=sflag, size = 0x8, scoped, tag = 'scoped memory for tpu_custom_call.1']
    #allocation5 [shape = 'u8[196608]{0}', space=vmem, size = 0x30000, scoped, tag = 'input window, operand 1']
    #allocation6 [shape = 's32[2]{0}', space=sflag, size = 0x8, scoped, tag = 'scoped memory for tpu_custom_call.1']
    #allocation7 [shape = 'u8[1024]{0}', space=vmem, size = 0x400, scoped, tag = 'output window, operand 0']
    #allocation8 [shape = 'u8[1024]{0}', space=vmem, size = 0x400, scoped, tag = 'output window, operand 1']
    #allocation9 [shape = 's32[2]{0}', space=sflag, size = 0x8, scoped, tag = 'scoped memory for tpu_custom_call.1']
    %9 = vsyncpa [#allocation3], 0
    %s10 = scalar_lea.sflag [#allocation3], 1
    %11 = vsyncpa %s10, 0
    %12 = vsyncpa [#allocation6], 0
    %s13 = scalar_lea.sflag [#allocation6], 1
    %14 = vsyncpa %s13, 0
    %15 = vsyncpa [#allocation4], 0
    %s16 = scalar_lea.sflag [#allocation4], 1
    %17 = vsyncpa %s16, 0
    %18 = vsyncpa [#allocation9], 0
    %s19 = scalar_lea.sflag [#allocation9], 1
    %20 = vsyncpa %s19, 0
    loop: start=0, step=1, limit=10
    $region2: #{tpu_custom_call.1} parent=1 // loop_pre_header
      _
    $region3: #{tpu_custom_call.1} parent=1 // loop_header
      %s22 = sphi 0, %s26
      %p23 = scmp.ge.s32.totalorder %s22, 10
      %s29 = sphi 0, %s41
      %s30 = sphi 0, %s37
      %s31 = sphi 0, %s29
      %s32 = sphi 0, %s30
      %s33 = sphi 0, %s31
      %s34 = sphi 0, %s32
      %s46 = sphi 0, %s48
      %s49 = sphi 0, %s46
      %s50 = sphi 0, %s49
      %s66 = sphi 0, %s50
      %s72 = sphi 0, %s74
      %s75 = sphi 0, %s72
      %s76 = sphi 0, %s75
      %s92 = sphi 0, %s76
      %s98 = sphi 0, %s100
      %s101 = sphi 0, %s98
      %s102 = sphi 0, %s101
      %s118 = sphi 0, %s102
      %s124 = sphi 0, %s126
      %s127 = sphi 0, %s124
      %s128 = sphi 0, %s127
      %s144 = sphi 0, %s128
    $region4: #{tpu_custom_call.1} parent=1 // loop_header_branch
      %25 = sbr.rel (%p23) target = $region8
    $region5: #{tpu_custom_call.1} parent=1 // loop_body
      %s27 = ssub.s32 %s22, 1
      %s28 = ssub.s32 %s22, 2
      %s35 = sadd.s32 1, %s30
      %p36 = scmp.ge.s32.totalorder %s35, 4
      %s37 = scalar_select %p36, 0, %s35
      %s38 = sadd.s32 1, %s29
      %s39 = scalar_select %p36, %s38, %s29
      %p40 = scmp.ge.s32.totalorder %s39, 2
      %s41 = scalar_select %p40, 0, %s39
      %s42 = ssub.s32 %s29, %s41
      %s43 = ssub.s32 %s30, %s37
      %s44 = sor.u32 %s42, %s43
      %p45 = scmp.eq.s32.totalorder %s44, 0
      %s47 = sadd.s32 %s46, 1
      %s48 = scalar_select %p45, %s46, %s47
      %p51 = pneg %p45
      %p52 = scmp.eq.s32.totalorder %s22, 7
      %p53 = por %p51, %p52
      %p54 = scmp.ne.s32.totalorder %s46, %s49
      %p55 = scmp.eq.s32.totalorder %s22, 0
      %p56 = por %p54, %p55
      %p57 = scmp.ne.s32.totalorder %s46, %s49
      %p58 = scmp.eq.s32.totalorder %s27, 7
      %p59 = por %p57, %p58
      %p60 = scmp.ne.s32.totalorder %s49, %s50
      %p61 = scmp.eq.s32.totalorder %s27, 0
      %p62 = por %p60, %p61
      %p63 = scmp.ne.s32.totalorder %s49, %s50
      %p64 = scmp.eq.s32.totalorder %s28, 7
      %p65 = por %p63, %p64
      %p67 = scmp.ne.s32.totalorder %s50, %s66
      %p68 = scmp.eq.s32.totalorder %s28, 0
      %p69 = por %p67, %p68
      %s70 = ssub.s32 %s29, %s41
      %p71 = scmp.eq.s32.totalorder %s70, 0
      %s73 = sadd.s32 %s72, 1
      %s74 = scalar_select %p71, %s72, %s73
      %p77 = pneg %p71
      %p78 = scmp.eq.s32.totalorder %s22, 7
      %p79 = por %p77, %p78
      %p80 = scmp.ne.s32.totalorder %s72, %s75
      %p81 = scmp.eq.s32.totalorder %s22, 0
      %p82 = por %p80, %p81
      %p83 = scmp.ne.s32.totalorder %s72, %s75
      %p84 = scmp.eq.s32.totalorder %s27, 7
      %p85 = por %p83, %p84
      %p86 = scmp.ne.s32.totalorder %s75, %s76
      %p87 = scmp.eq.s32.totalorder %s27, 0
      %p88 = por %p86, %p87
      %p89 = scmp.ne.s32.totalorder %s75, %s76
      %p90 = scmp.eq.s32.totalorder %s28, 7
      %p91 = por %p89, %p90
      %p93 = scmp.ne.s32.totalorder %s76, %s92
      %p94 = scmp.eq.s32.totalorder %s28, 0
      %p95 = por %p93, %p94
      %s96 = ssub.s32 %s29, %s41
      %p97 = scmp.eq.s32.totalorder %s96, 0
      %s99 = sadd.s32 %s98, 1
      %s100 = scalar_select %p97, %s98, %s99
      %p103 = pneg %p97
      %p104 = scmp.eq.s32.totalorder %s22, 7
      %p105 = por %p103, %p104
      %p106 = scmp.ne.s32.totalorder %s98, %s101
      %p107 = scmp.eq.s32.totalorder %s22, 0
      %p108 = por %p106, %p107
      %p109 = scmp.ne.s32.totalorder %s98, %s101
      %p110 = scmp.eq.s32.totalorder %s27, 7
      %p111 = por %p109, %p110
      %p112 = scmp.ne.s32.totalorder %s101, %s102
      %p113 = scmp.eq.s32.totalorder %s27, 0
      %p114 = por %p112, %p113
      %p115 = scmp.ne.s32.totalorder %s101, %s102
      %p116 = scmp.eq.s32.totalorder %s28, 7
      %p117 = por %p115, %p116
      %p119 = scmp.ne.s32.totalorder %s102, %s118
      %p120 = scmp.eq.s32.totalorder %s28, 0
      %p121 = por %p119, %p120
      %s122 = ssub.s32 %s29, %s41
      %p123 = scmp.eq.s32.totalorder %s122, 0
      %s125 = sadd.s32 %s124, 1
      %s126 = scalar_select %p123, %s124, %s125
      %p129 = pneg %p123
      %p130 = scmp.eq.s32.totalorder %s22, 7
      %p131 = por %p129, %p130
      %p132 = scmp.ne.s32.totalorder %s124, %s127
      %p133 = scmp.eq.s32.totalorder %s22, 0
      %p134 = por %p132, %p133
      %p135 = scmp.ne.s32.totalorder %s124, %s127
      %p136 = scmp.eq.s32.totalorder %s27, 7
      %p137 = por %p135, %p136
      %p138 = scmp.ne.s32.totalorder %s127, %s128
      %p139 = scmp.eq.s32.totalorder %s27, 0
      %p140 = por %p138, %p139
      %p141 = scmp.ne.s32.totalorder %s127, %s128
      %p142 = scmp.eq.s32.totalorder %s28, 7
      %p143 = por %p141, %p142
      %p145 = scmp.ne.s32.totalorder %s128, %s144
      %p146 = scmp.eq.s32.totalorder %s28, 0
      %p147 = por %p145, %p146
      %p148 = scmp.le.s32.totalorder 1, %s22
      %p149 = scmp.lt.s32.totalorder %s22, 9
      %p150 = pnand %p148, %p149
      %p151 = pneg %p150
      // Predicated region
      $region9: #{tpu_custom_call.1} parent=5 // pred_check
        _
      $region10: #{tpu_custom_call.1} parent=5 // pred_check_branch
        %153 = sbr.rel (%p150) target = $region12
      $region11: #{tpu_custom_call.1} parent=5 // pred_region
        %s154 = ssub.s32 %s22, 1
      $region12: #{tpu_custom_call.1} parent=5 // pred_fallthru
        _
      %p155 = scmp.lt.s32.totalorder %s22, 8
      // Predicated region
      $region13: #{tpu_custom_call.1} parent=5 // pred_check
        %p156 = pneg %p155
      $region14: #{tpu_custom_call.1} parent=5 // pred_check_branch
        %158 = sbr.rel (%p156) target = $region16
      $region15: #{tpu_custom_call.1} parent=5 // pred_region
        // Predicated region
        $region17: #{tpu_custom_call.1} parent=15 // pred_check
          %p159 = pneg %p56
        $region18: #{tpu_custom_call.1} parent=15 // pred_check_branch
          %161 = sbr.rel (%p159) target = $region20
        $region19: #{tpu_custom_call.1} parent=15 // pred_region
          %s162 = sand.u32 %s46, 1
          %s163 = scalar_lea.sflag [#allocation3], %s162
          %s164 = sand.u32 %s46, 1
          %s165 = smul.addr %s164, 192
          %s166 = scalar_lea.vmem [#allocation2], %s165
          %s167 = smul.u32 16, %s30
          %169 = vsyncadd %s163, 0
          %s170 = smul.addr %s167, 3
          %s171 = smul.addr %s29, 192
          %s172 = sadd.s32 %s170, %s171
          %s173 = smul.addr %s172, 4
          %s174 = scalar_lea.hbm %s0, %s173
          %s175 = sshll.u32 %s174, 4
          %s176 = int_to_ptr.hbm [resolvable:$true] %s175
          %s177 = sshll.u32 %s166, 4
          %s178 = int_to_ptr.vmem [resolvable:$true] %s177
          %183 = dma.hbm_to_vmem [thread:$0]  %s176, 3072, %s178, %s163, 192, 192, 12
        $region20: #{tpu_custom_call.1} parent=15 // pred_fallthru
          _
        // Predicated region
        $region21: #{tpu_custom_call.1} parent=15 // pred_check
          %p184 = pneg %p82
        $region22: #{tpu_custom_call.1} parent=15 // pred_check_branch
          %186 = sbr.rel (%p184) target = $region24
        $region23: #{tpu_custom_call.1} parent=15 // pred_region
          %s187 = sand.u32 %s72, 1
          %s188 = scalar_lea.sflag [#allocation6], %s187
          %s189 = sand.u32 %s72, 1
          %s190 = smul.addr %s189, 192
          %s191 = scalar_lea.vmem [#allocation5], %s190
          %193 = vsyncadd %s188, 0
          %s194 = smul.addr %s29, 48
          %s195 = smul.addr %s194, 4
          %s196 = scalar_lea.hbm %s1, %s195
          %s197 = sshll.u32 %s196, 4
          %s198 = int_to_ptr.hbm [resolvable:$true] %s197
          %s199 = sshll.u32 %s191, 4
          %s200 = int_to_ptr.vmem [resolvable:$true] %s199
          %205 = dma.hbm_to_vmem [thread:$0]  %s198, 3072, %s200, %s188, 64, 64, 4
        $region24: #{tpu_custom_call.1} parent=15 // pred_fallthru
          _
      $region16: #{tpu_custom_call.1} parent=5 // pred_fallthru
        _
      %p206 = scmp.le.s32.totalorder 1, %s22
      %p207 = scmp.lt.s32.totalorder %s22, 9
      %p208 = pnand %p206, %p207
      %p209 = pneg %p208
      // Predicated region
      $region25: #{tpu_custom_call.1} parent=5 // pred_check
        _
      $region26: #{tpu_custom_call.1} parent=5 // pred_check_branch
        %211 = sbr.rel (%p208) target = $region28
      $region27: #{tpu_custom_call.1} parent=5 // pred_region
        %s212 = ssub.s32 %s22, 1
        %s213 = sand.u32 %s49, 1
        %s214 = scalar_lea.sflag [#allocation3], %s213
        %s215 = sand.u32 %s49, 1
        %s216 = smul.addr %s215, 192
        %s217 = scalar_lea.vmem [#allocation2], %s216
        // Predicated region
        $region29: #{tpu_custom_call.1} parent=27 // pred_check
          %p218 = pneg %p62
        $region30: #{tpu_custom_call.1} parent=27 // pred_check_branch
          %220 = sbr.rel (%p218) target = $region32
        $region31: #{tpu_custom_call.1} parent=27 // pred_region
          %222 = dma.done %s214, 3072
        $region32: #{tpu_custom_call.1} parent=27 // pred_fallthru
          _
        %s223 = sand.u32 %s75, 1
        %s224 = scalar_lea.sflag [#allocation6], %s223
        %s225 = sand.u32 %s75, 1
        %s226 = smul.addr %s225, 192
        %s227 = scalar_lea.vmem [#allocation5], %s226
        // Predicated region
        $region33: #{tpu_custom_call.1} parent=27 // pred_check
          %p228 = pneg %p88
        $region34: #{tpu_custom_call.1} parent=27 // pred_check_branch
          %230 = sbr.rel (%p228) target = $region36
        $region35: #{tpu_custom_call.1} parent=27 // pred_region
          %232 = dma.done %s224, 3072
        $region36: #{tpu_custom_call.1} parent=27 // pred_fallthru
          _
        %s233 = sand.u32 %s49, 1
        %s234 = scalar_lea.sflag [#allocation3], %s233
        %s235 = sand.u32 %s49, 1
        %s236 = smul.addr %s235, 192
        %s237 = scalar_lea.vmem [#allocation2], %s236
        %p238 = pneg %p62
        %p239 = pneg %p59
        %s240 = sand.u32 %s75, 1
        %s241 = scalar_lea.sflag [#allocation6], %s240
        %s242 = sand.u32 %s75, 1
        %s243 = smul.addr %s242, 192
        %s244 = scalar_lea.vmem [#allocation5], %s243
        %p245 = pneg %p88
        %p246 = pneg %p85
        %p247 = pneg %p114
        %p248 = pneg %p111
        %s249 = sand.u32 %s101, 1
        %s250 = scalar_lea.sflag [#allocation4], %s249
        %s251 = sand.u32 %s101, 1
        %s252 = scalar_lea.vmem [#allocation7], %s251
        %p253 = pneg %p140
        %p254 = pneg %p137
        %s255 = sand.u32 %s127, 1
        %s256 = scalar_lea.sflag [#allocation9], %s255
        %s257 = sand.u32 %s127, 1
        %s258 = scalar_lea.vmem [#allocation8], %s257
        %s259 = smul.u32 16, %s32
        %p260 = scmp.eq.s32.totalorder %s32, 0
        // Predicated region
        $region37: #{tpu_custom_call.1} parent=27 // pred_check
          %p261 = pneg %p260
        $region38: #{tpu_custom_call.1} parent=27 // pred_check_branch
          %263 = sbr.rel (%p261) target = $region40
        $region39: #{tpu_custom_call.1} parent=27 // pred_region
          %264 = vst [vmem:[%s252] sm:$0x1] 0.0
          %265 = vst [vmem:[%s258] sm:$0x1] 0.0
        $region40: #{tpu_custom_call.1} parent=27 // pred_fallthru
          _
        %v266 = vld [vmem:[%s217] sm:$0xff]
        %v267 = vld [vmem:[%s217 + $0x8] sm:$0xf]
        %v268 = vld [vmem:[%s217 + $0xc] sm:$0xff]
        %v269 = vld [vmem:[%s217 + $0x14] sm:$0xf]
        %v270 = vld [vmem:[%s217 + $0x18] sm:$0xff]
        %v271 = vld [vmem:[%s217 + $0x20] sm:$0xf]
        %v272 = vld [vmem:[%s217 + $0x24] sm:$0xff]
        %v273 = vld [vmem:[%s217 + $0x2c] sm:$0xf]
        %v274 = vld [vmem:[%s217 + $0x30] sm:$0xff]
        %v275 = vld [vmem:[%s217 + $0x38] sm:$0xf]
        %v276 = vld [vmem:[%s217 + $0x3c] sm:$0xff]
        %v277 = vld [vmem:[%s217 + $0x44] sm:$0xf]
        %v278 = vld [vmem:[%s217 + $0x48] sm:$0xff]
        %v279 = vld [vmem:[%s217 + $0x50] sm:$0xf]
        %v280 = vld [vmem:[%s217 + $0x54] sm:$0xff]
        %v281 = vld [vmem:[%s217 + $0x5c] sm:$0xf]
        %v282 = vld [vmem:[%s217 + $0x60] sm:$0xff]
        %v283 = vld [vmem:[%s217 + $0x68] sm:$0xf]
        %v284 = vld [vmem:[%s217 + $0x6c] sm:$0xff]
        %v285 = vld [vmem:[%s217 + $0x74] sm:$0xf]
        %v286 = vld [vmem:[%s217 + $0x78] sm:$0xff]
        %v287 = vld [vmem:[%s217 + $0x80] sm:$0xf]
        %v288 = vld [vmem:[%s217 + $0x84] sm:$0xff]
        %v289 = vld [vmem:[%s217 + $0x8c] sm:$0xf]
        %v290 = vld [vmem:[%s217 + $0x90] sm:$0xff]
        %v291 = vld [vmem:[%s217 + $0x98] sm:$0xf]
        %v292 = vld [vmem:[%s217 + $0x9c] sm:$0xff]
        %v293 = vld [vmem:[%s217 + $0xa4] sm:$0xf]
        %v294 = vld [vmem:[%s217 + $0xa8] sm:$0xff]
        %v295 = vld [vmem:[%s217 + $0xb0] sm:$0xf]
        %v296 = vld [vmem:[%s217 + $0xb4] sm:$0xff]
        %v297 = vld [vmem:[%s217 + $0xbc] sm:$0xf]
        %v298 = vld [vmem:[%s227] sm:$0xf]
        %v299 = vld [vmem:[%s227 + $0x4] sm:$0xf]
        %v300 = vld [vmem:[%s227 + $0x8] sm:$0xf]
        %v301 = vld [vmem:[%s227 + $0xc] sm:$0xf]
        %v302 = vld [vmem:[%s227 + $0x10] sm:$0xf]
        %v303 = vld [vmem:[%s227 + $0x14] sm:$0xf]
        %v304 = vld [vmem:[%s227 + $0x18] sm:$0xf]
        %v305 = vld [vmem:[%s227 + $0x1c] sm:$0xf]
        %v306 = vld [vmem:[%s227 + $0x20] sm:$0xf]
        %v307 = vld [vmem:[%s227 + $0x24] sm:$0xf]
        %v308 = vld [vmem:[%s227 + $0x28] sm:$0xf]
        %v309 = vld [vmem:[%s227 + $0x2c] sm:$0xf]
        %v310 = vld [vmem:[%s227 + $0x30] sm:$0xf]
        %v311 = vld [vmem:[%s227 + $0x34] sm:$0xf]
        %v312 = vld [vmem:[%s227 + $0x38] sm:$0xf]
        %v313 = vld [vmem:[%s227 + $0x3c] sm:$0xf]
        %v314 = vld [vmem:[%s227 + $0x40] sm:$0xf]
        %v315 = vld [vmem:[%s227 + $0x44] sm:$0xf]
        %v316 = vld [vmem:[%s227 + $0x48] sm:$0xf]
        %v317 = vld [vmem:[%s227 + $0x4c] sm:$0xf]
        %v318 = vld [vmem:[%s227 + $0x50] sm:$0xf]
        %v319 = vld [vmem:[%s227 + $0x54] sm:$0xf]
        %v320 = vld [vmem:[%s227 + $0x58] sm:$0xf]
        %v321 = vld [vmem:[%s227 + $0x5c] sm:$0xf]
        %v322 = vld [vmem:[%s227 + $0x60] sm:$0xf]
        %v323 = vld [vmem:[%s227 + $0x64] sm:$0xf]
        %v324 = vld [vmem:[%s227 + $0x68] sm:$0xf]
        %v325 = vld [vmem:[%s227 + $0x6c] sm:$0xf]
        %v326 = vld [vmem:[%s227 + $0x70] sm:$0xf]
        %v327 = vld [vmem:[%s227 + $0x74] sm:$0xf]
        %v328 = vld [vmem:[%s227 + $0x78] sm:$0xf]
        %v329 = vld [vmem:[%s227 + $0x7c] sm:$0xf]
        %v330 = vld [vmem:[%s227 + $0x80] sm:$0xf]
        %v331 = vld [vmem:[%s227 + $0x84] sm:$0xf]
        %v332 = vld [vmem:[%s227 + $0x88] sm:$0xf]
        %v333 = vld [vmem:[%s227 + $0x8c] sm:$0xf]
        %v334 = vld [vmem:[%s227 + $0x90] sm:$0xf]
        %v335 = vld [vmem:[%s227 + $0x94] sm:$0xf]
        %v336 = vld [vmem:[%s227 + $0x98] sm:$0xf]
        %v337 = vld [vmem:[%s227 + $0x9c] sm:$0xf]
        %v338 = vld [vmem:[%s227 + $0xa0] sm:$0xf]
        %v339 = vld [vmem:[%s227 + $0xa4] sm:$0xf]
        %v340 = vld [vmem:[%s227 + $0xa8] sm:$0xf]
        %v341 = vld [vmem:[%s227 + $0xac] sm:$0xf]
        %v342 = vld [vmem:[%s227 + $0xb0] sm:$0xf]
        %v343 = vld [vmem:[%s227 + $0xb4] sm:$0xf]
        %v344 = vld [vmem:[%s227 + $0xb8] sm:$0xf]
        %v345 = vld [vmem:[%s227 + $0xbc] sm:$0xf]
        %v378 = vunpack.c.l.b16 %v266
        %v379 = vunpack.c.h.b16 %v266
        %v380 = vunpack.c.l.b16 %v267
        %v381 = vunpack.c.l.b16 %v268
        %v382 = vunpack.c.h.b16 %v268
        %v383 = vunpack.c.l.b16 %v269
        %v384 = vunpack.c.l.b16 %v270
        %v385 = vunpack.c.h.b16 %v270
        %v386 = vunpack.c.l.b16 %v271
        %v387 = vunpack.c.l.b16 %v272
        %v388 = vunpack.c.h.b16 %v272
        %v389 = vunpack.c.l.b16 %v273
        %v390 = vunpack.c.l.b16 %v274
        %v391 = vunpack.c.h.b16 %v274
        %v392 = vunpack.c.l.b16 %v275
        %v393 = vunpack.c.l.b16 %v276
        %v394 = vunpack.c.h.b16 %v276
        %v395 = vunpack.c.l.b16 %v277
        %v396 = vunpack.c.l.b16 %v278
        %v397 = vunpack.c.h.b16 %v278
        %v398 = vunpack.c.l.b16 %v279
        %v399 = vunpack.c.l.b16 %v280
        %v400 = vunpack.c.h.b16 %v280
        %v401 = vunpack.c.l.b16 %v281
        %v402 = vunpack.c.l.b16 %v282
        %v403 = vunpack.c.h.b16 %v282
        %v404 = vunpack.c.l.b16 %v283
        %v405 = vunpack.c.l.b16 %v284
        %v406 = vunpack.c.h.b16 %v284
        %v407 = vunpack.c.l.b16 %v285
        %v408 = vunpack.c.l.b16 %v286
        %v409 = vunpack.c.h.b16 %v286
        %v410 = vunpack.c.l.b16 %v287
        %v411 = vunpack.c.l.b16 %v288
        %v412 = vunpack.c.h.b16 %v288
        %v413 = vunpack.c.l.b16 %v289
        %v414 = vunpack.c.l.b16 %v290
        %v415 = vunpack.c.h.b16 %v290
        %v416 = vunpack.c.l.b16 %v291
        %v417 = vunpack.c.l.b16 %v292
        %v418 = vunpack.c.h.b16 %v292
        %v419 = vunpack.c.l.b16 %v293
        %v420 = vunpack.c.l.b16 %v294
        %v421 = vunpack.c.h.b16 %v294
        %v422 = vunpack.c.l.b16 %v295
        %v423 = vunpack.c.l.b16 %v296
        %v424 = vunpack.c.h.b16 %v296
        %v425 = vunpack.c.l.b16 %v297
        %v426 = vpack.c.b16 %v381, %v378
        %v427 = vpack.c.b16 %v382, %v379
        %v428 = vpack.c.b16 %v383, %v380
        %v429 = vpack.c.b16 %v387, %v384
        %v430 = vpack.c.b16 %v388, %v385
        %v431 = vpack.c.b16 %v389, %v386
        %v432 = vpack.c.b16 %v393, %v390
        %v433 = vpack.c.b16 %v394, %v391
        %v434 = vpack.c.b16 %v395, %v392
        %v435 = vpack.c.b16 %v399, %v396
        %v436 = vpack.c.b16 %v400, %v397
        %v437 = vpack.c.b16 %v401, %v398
        %v438 = vpack.c.b16 %v405, %v402
        %v439 = vpack.c.b16 %v406, %v403
        %v440 = vpack.c.b16 %v407, %v404
        %v441 = vpack.c.b16 %v411, %v408
        %v442 = vpack.c.b16 %v412, %v409
        %v443 = vpack.c.b16 %v413, %v410
        %v444 = vpack.c.b16 %v417, %v414
        %v445 = vpack.c.b16 %v418, %v415
        %v446 = vpack.c.b16 %v419, %v416
        %v447 = vpack.c.b16 %v423, %v420
        %v448 = vpack.c.b16 %v424, %v421
        %v449 = vpack.c.b16 %v425, %v422
        %v522 = vunpack.c.l.b16 %v298
        %v523 = vunpack.c.l.b16 %v299
        %v524 = vunpack.c.l.b16 %v300
        %v525 = vunpack.c.l.b16 %v301
        %v526 = vunpack.c.l.b16 %v302
        %v527 = vunpack.c.l.b16 %v303
        %v528 = vunpack.c.l.b16 %v304
        %v529 = vunpack.c.l.b16 %v305
        %v530 = vunpack.c.l.b16 %v306
        %v531 = vunpack.c.l.b16 %v307
        %v532 = vunpack.c.l.b16 %v308
        %v533 = vunpack.c.l.b16 %v309
        %v534 = vunpack.c.l.b16 %v310
        %v535 = vunpack.c.l.b16 %v311
        %v536 = vunpack.c.l.b16 %v312
        %v537 = vunpack.c.l.b16 %v313
        %v538 = vunpack.c.l.b16 %v314
        %v539 = vunpack.c.l.b16 %v315
        %v540 = vunpack.c.l.b16 %v316
        %v541 = vunpack.c.l.b16 %v317
        %v542 = vunpack.c.l.b16 %v318
        %v543 = vunpack.c.l.b16 %v319
        %v544 = vunpack.c.l.b16 %v320
        %v545 = vunpack.c.l.b16 %v321
        %v546 = vunpack.c.l.b16 %v322
        %v547 = vunpack.c.l.b16 %v323
        %v548 = vunpack.c.l.b16 %v324
        %v549 = vunpack.c.l.b16 %v325
        %v550 = vunpack.c.l.b16 %v326
        %v551 = vunpack.c.l.b16 %v327
        %v552 = vunpack.c.l.b16 %v328
        %v553 = vunpack.c.l.b16 %v329
        %v554 = vunpack.c.l.b16 %v330
        %v555 = vunpack.c.l.b16 %v331
        %v556 = vunpack.c.l.b16 %v332
        %v557 = vunpack.c.l.b16 %v333
        %v558 = vunpack.c.l.b16 %v334
        %v559 = vunpack.c.l.b16 %v335
        %v560 = vunpack.c.l.b16 %v336
        %v561 = vunpack.c.l.b16 %v337
        %v562 = vunpack.c.l.b16 %v338
        %v563 = vunpack.c.l.b16 %v339
        %v564 = vunpack.c.l.b16 %v340
        %v565 = vunpack.c.l.b16 %v341
        %v566 = vunpack.c.l.b16 %v342
        %v567 = vunpack.c.l.b16 %v343
        %v568 = vunpack.c.l.b16 %v344
        %v569 = vunpack.c.l.b16 %v345
        %v570 = vpack.c.b16 %v523, %v522
        %v571 = vpack.c.b16 %v525, %v524
        %v572 = vpack.c.b16 %v527, %v526
        %v573 = vpack.c.b16 %v529, %v528
        %v574 = vpack.c.b16 %v531, %v530
        %v575 = vpack.c.b16 %v533, %v532
        %v576 = vpack.c.b16 %v535, %v534
        %v577 = vpack.c.b16 %v537, %v536
        %v578 = vpack.c.b16 %v539, %v538
        %v579 = vpack.c.b16 %v541, %v540
        %v580 = vpack.c.b16 %v543, %v542
        %v581 = vpack.c.b16 %v545, %v544
        %v582 = vpack.c.b16 %v547, %v546
        %v583 = vpack.c.b16 %v549, %v548
        %v584 = vpack.c.b16 %v551, %v550
        %v585 = vpack.c.b16 %v553, %v552
        %v586 = vpack.c.b16 %v555, %v554
        %v587 = vpack.c.b16 %v557, %v556
        %v588 = vpack.c.b16 %v559, %v558
        %v589 = vpack.c.b16 %v561, %v560
        %v590 = vpack.c.b16 %v563, %v562
        %v591 = vpack.c.b16 %v565, %v564
        %v592 = vpack.c.b16 %v567, %v566
        %v593 = vpack.c.b16 %v569, %v568
        %618 = vmatpush.bf16.msra.mxu0 %v577
        %619 = vmatpush.bf16.msra.mxu0 %v576
        %620 = vmatpush.bf16.msra.mxu0 %v575
        %621 = vmatpush.bf16.msra.mxu0 %v574
        %622 = vmatpush.bf16.msra.mxu0 %v573
        %623 = vmatpush.bf16.msra.mxu0 %v572
        %624 = vmatpush.bf16.msra.mxu0 %v571
        %625 = vmatpush.bf16.msra.mxu0 %v570
        %626 = vmatmul.bf16.gmra.mxu0 %v426
        %v627 = vpop.f32.mrf.mxu0
        %v628 = vadd.f32 0.0, %v627
        %v629 = vpop.f32.mrf.mxu0
        %v630 = vadd.f32 0.0, %v629
        %631 = vmatmul.bf16.gmra.mxu0 %v429
        %v632 = vpop.f32.mrf.mxu0
        %v633 = vadd.f32 0.0, %v632
        %v634 = vpop.f32.mrf.mxu0
        %v635 = vadd.f32 0.0, %v634
        %636 = vmatmul.bf16.gmra.mxu0 %v432
        %v637 = vpop.f32.mrf.mxu0
        %v638 = vadd.f32 0.0, %v637
        %v639 = vpop.f32.mrf.mxu0
        %v640 = vadd.f32 0.0, %v639
        %641 = vmatmul.bf16.gmra.mxu0 %v435
        %v642 = vpop.f32.mrf.mxu0
        %v643 = vadd.f32 0.0, %v642
        %v644 = vpop.f32.mrf.mxu0
        %v645 = vadd.f32 0.0, %v644
        %646 = vmatmul.bf16.gmra.mxu0 %v438
        %v647 = vpop.f32.mrf.mxu0
        %v648 = vadd.f32 0.0, %v647
        %v649 = vpop.f32.mrf.mxu0
        %v650 = vadd.f32 0.0, %v649
        %651 = vmatmul.bf16.gmra.mxu0 %v441
        %v652 = vpop.f32.mrf.mxu0
        %v653 = vadd.f32 0.0, %v652
        %v654 = vpop.f32.mrf.mxu0
        %v655 = vadd.f32 0.0, %v654
        %656 = vmatmul.bf16.gmra.mxu0 %v444
        %v657 = vpop.f32.mrf.mxu0
        %v658 = vadd.f32 0.0, %v657
        %v659 = vpop.f32.mrf.mxu0
        %v660 = vadd.f32 0.0, %v659
        %661 = vmatmul.bf16.gmra.mxu0 %v447
        %v662 = vpop.f32.mrf.mxu0
        %v663 = vadd.f32 0.0, %v662
        %v664 = vpop.f32.mrf.mxu0
        %v665 = vadd.f32 0.0, %v664
        %666 = vdwg.mxu0
        %667 = vmatpush.bf16.msra.mxu0 %v585
        %668 = vmatpush.bf16.msra.mxu0 %v584
        %669 = vmatpush.bf16.msra.mxu0 %v583
        %670 = vmatpush.bf16.msra.mxu0 %v582
        %671 = vmatpush.bf16.msra.mxu0 %v581
        %672 = vmatpush.bf16.msra.mxu0 %v580
        %673 = vmatpush.bf16.msra.mxu0 %v579
        %674 = vmatpush.bf16.msra.mxu0 %v578
        %675 = vmatmul.bf16.gmra.mxu0 %v427
        %v676 = vpop.f32.mrf.mxu0
        %v677 = vadd.f32 %v628, %v676
        %v678 = vpop.f32.mrf.mxu0
        %v679 = vadd.f32 %v630, %v678
        %680 = vmatmul.bf16.gmra.mxu0 %v430
        %v681 = vpop.f32.mrf.mxu0
        %v682 = vadd.f32 %v633, %v681
        %v683 = vpop.f32.mrf.mxu0
        %v684 = vadd.f32 %v635, %v683
        %685 = vmatmul.bf16.gmra.mxu0 %v433
        %v686 = vpop.f32.mrf.mxu0
        %v687 = vadd.f32 %v638, %v686
        %v688 = vpop.f32.mrf.mxu0
        %v689 = vadd.f32 %v640, %v688
        %690 = vmatmul.bf16.gmra.mxu0 %v436
        %v691 = vpop.f32.mrf.mxu0
        %v692 = vadd.f32 %v643, %v691
        %v693 = vpop.f32.mrf.mxu0
        %v694 = vadd.f32 %v645, %v693
        %695 = vmatmul.bf16.gmra.mxu0 %v439
        %v696 = vpop.f32.mrf.mxu0
        %v697 = vadd.f32 %v648, %v696
        %v698 = vpop.f32.mrf.mxu0
        %v699 = vadd.f32 %v650, %v698
        %700 = vmatmul.bf16.gmra.mxu0 %v442
        %v701 = vpop.f32.mrf.mxu0
        %v702 = vadd.f32 %v653, %v701
        %v703 = vpop.f32.mrf.mxu0
        %v704 = vadd.f32 %v655, %v703
        %705 = vmatmul.bf16.gmra.mxu0 %v445
        %v706 = vpop.f32.mrf.mxu0
        %v707 = vadd.f32 %v658, %v706
        %v708 = vpop.f32.mrf.mxu0
        %v709 = vadd.f32 %v660, %v708
        %710 = vmatmul.bf16.gmra.mxu0 %v448
        %v711 = vpop.f32.mrf.mxu0
        %v712 = vadd.f32 %v663, %v711
        %v713 = vpop.f32.mrf.mxu0
        %v714 = vadd.f32 %v665, %v713
        %715 = vdwg.mxu0
        %716 = vmatpush.bf16.msra.mxu0 %v593
        %717 = vmatpush.bf16.msra.mxu0 %v592
        %718 = vmatpush.bf16.msra.mxu0 %v591
        %719 = vmatpush.bf16.msra.mxu0 %v590
        %720 = vmatpush.bf16.msra.mxu0 %v589
        %721 = vmatpush.bf16.msra.mxu0 %v588
        %722 = vmatpush.bf16.msra.mxu0 %v587
        %723 = vmatpush.bf16.msra.mxu0 %v586
        %724 = vmatmul.bf16.gmra.mxu0 %v428
        %v725 = vpop.f32.mrf.mxu0
        %v726 = vadd.f32 %v677, %v725
        %v727 = vpop.f32.mrf.mxu0
        %v728 = vadd.f32 %v679, %v727
        %729 = vmatmul.bf16.gmra.mxu0 %v431
        %v730 = vpop.f32.mrf.mxu0
        %v731 = vadd.f32 %v682, %v730
        %v732 = vpop.f32.mrf.mxu0
        %v733 = vadd.f32 %v684, %v732
        %734 = vmatmul.bf16.gmra.mxu0 %v434
        %v735 = vpop.f32.mrf.mxu0
        %v736 = vadd.f32 %v687, %v735
        %v737 = vpop.f32.mrf.mxu0
        %v738 = vadd.f32 %v689, %v737
        %739 = vmatmul.bf16.gmra.mxu0 %v437
        %v740 = vpop.f32.mrf.mxu0
        %v741 = vadd.f32 %v692, %v740
        %v742 = vpop.f32.mrf.mxu0
        %v743 = vadd.f32 %v694, %v742
        %744 = vmatmul.bf16.gmra.mxu0 %v440
        %v745 = vpop.f32.mrf.mxu0
        %v746 = vadd.f32 %v697, %v745
        %v747 = vpop.f32.mrf.mxu0
        %v748 = vadd.f32 %v699, %v747
        %749 = vmatmul.bf16.gmra.mxu0 %v443
        %v750 = vpop.f32.mrf.mxu0
        %v751 = vadd.f32 %v702, %v750
        %v752 = vpop.f32.mrf.mxu0
        %v753 = vadd.f32 %v704, %v752
        %754 = vmatmul.bf16.gmra.mxu0 %v446
        %v755 = vpop.f32.mrf.mxu0
        %v756 = vadd.f32 %v707, %v755
        %v757 = vpop.f32.mrf.mxu0
        %v758 = vadd.f32 %v709, %v757
        %759 = vmatmul.bf16.gmra.mxu0 %v449
        %v760 = vpop.f32.mrf.mxu0
        %v761 = vadd.f32 %v712, %v760
        %v762 = vpop.f32.mrf.mxu0
        %v763 = vadd.f32 %v714, %v762
        %764 = vdwg.mxu0
        %v765 = vld [vmem:[%s252] sm:$0x1]
        %v766 = vadd.f32 %v726, %v728
        %v767 = vadd.f32 %v766, %v731
        %v768 = vadd.f32 %v767, %v733
        %v769 = vadd.f32 %v768, %v736
        %v770 = vadd.f32 %v769, %v738
        %v771 = vadd.f32 %v770, %v741
        %v772 = vadd.f32 %v771, %v743
        %v773 = vadd.f32 %v772, %v746
        %v774 = vadd.f32 %v773, %v748
        %v775 = vadd.f32 %v774, %v751
        %v776 = vadd.f32 %v775, %v753
        %v777 = vadd.f32 %v776, %v756
        %v778 = vadd.f32 %v777, %v758
        %v779 = vadd.f32 %v778, %v761
        %v780 = vadd.f32 %v779, %v763
        %v781 = vrot.slane %v780, 4
        %v782 = vadd.f32 %v780, %v781
        %v783 = vrot.slane %v782, 2
        %v784 = vadd.f32 %v782, %v783
        %v785 = vrot.slane %v784, 1
        %v786 = vadd.f32 %v784, %v785
        %v787 = vadd.f32 %v765, %v786
        %788 = vst [vmem:[%s252] sm:$0x1] %v787
        %v789 = vld [vmem:[%s258] sm:$0x1]
        %v790 = vmul.f32 %v726, %v726
        %v791 = vmul.f32 %v728, %v728
        %v792 = vmul.f32 %v731, %v731
        %v793 = vmul.f32 %v733, %v733
        %v794 = vmul.f32 %v736, %v736
        %v795 = vmul.f32 %v738, %v738
        %v796 = vmul.f32 %v741, %v741
        %v797 = vmul.f32 %v743, %v743
        %v798 = vmul.f32 %v746, %v746
        %v799 = vmul.f32 %v748, %v748
        %v800 = vmul.f32 %v751, %v751
        %v801 = vmul.f32 %v753, %v753
        %v802 = vmul.f32 %v756, %v756
        %v803 = vmul.f32 %v758, %v758
        %v804 = vmul.f32 %v761, %v761
        %v805 = vmul.f32 %v763, %v763
        %v806 = vadd.f32 %v790, %v791
        %v807 = vadd.f32 %v806, %v792
        %v808 = vadd.f32 %v807, %v793
        %v809 = vadd.f32 %v808, %v794
        %v810 = vadd.f32 %v809, %v795
        %v811 = vadd.f32 %v810, %v796
        %v812 = vadd.f32 %v811, %v797
        %v813 = vadd.f32 %v812, %v798
        %v814 = vadd.f32 %v813, %v799
        %v815 = vadd.f32 %v814, %v800
        %v816 = vadd.f32 %v815, %v801
        %v817 = vadd.f32 %v816, %v802
        %v818 = vadd.f32 %v817, %v803
        %v819 = vadd.f32 %v818, %v804
        %v820 = vadd.f32 %v819, %v805
        %v821 = vrot.slane %v820, 4
        %v822 = vadd.f32 %v820, %v821
        %v823 = vrot.slane %v822, 2
        %v824 = vadd.f32 %v822, %v823
        %v825 = vrot.slane %v824, 1
        %v826 = vadd.f32 %v824, %v825
        %v827 = vadd.f32 %v789, %v826
        %828 = vst [vmem:[%s258] sm:$0x1] %v827
        %s829 = sand.u32 %s101, 1
        %s830 = scalar_lea.sflag [#allocation4], %s829
        %s831 = sand.u32 %s101, 1
        %s832 = scalar_lea.vmem [#allocation7], %s831
        %s833 = sand.u32 %s127, 1
        %s834 = scalar_lea.sflag [#allocation9], %s833
        %s835 = sand.u32 %s127, 1
        %s836 = scalar_lea.vmem [#allocation8], %s835
        // Predicated region
        $region41: #{tpu_custom_call.1} parent=27 // pred_check
          %p837 = pneg %p111
        $region42: #{tpu_custom_call.1} parent=27 // pred_check_branch
          %839 = sbr.rel (%p837) target = $region44
        $region43: #{tpu_custom_call.1} parent=27 // pred_region
          %841 = vsyncadd %s830, 0
          %s842 = scalar_lea.hbm %s2, %s31
          %s844 = sshll.u32 %s832, 4
          %s845 = int_to_ptr.vmem [resolvable:$true] %s844
          %s846 = sshll.u32 %s842, 4
          %s847 = int_to_ptr.hbm [resolvable:$true] %s846
          %849 = dma.vmem_to_hbm [thread:$0]  %s845, 16, %s847, %s830
        $region44: #{tpu_custom_call.1} parent=27 // pred_fallthru
          _
        // Predicated region
        $region45: #{tpu_custom_call.1} parent=27 // pred_check
          %p850 = pneg %p137
        $region46: #{tpu_custom_call.1} parent=27 // pred_check_branch
          %852 = sbr.rel (%p850) target = $region48
        $region47: #{tpu_custom_call.1} parent=27 // pred_region
          %854 = vsyncadd %s834, 0
          %s855 = scalar_lea.hbm %s3, %s31
          %s857 = sshll.u32 %s836, 4
          %s858 = int_to_ptr.vmem [resolvable:$true] %s857
          %s859 = sshll.u32 %s855, 4
          %s860 = int_to_ptr.hbm [resolvable:$true] %s859
          %862 = dma.vmem_to_hbm [thread:$0]  %s858, 16, %s860, %s834
        $region48: #{tpu_custom_call.1} parent=27 // pred_fallthru
          _
      $region28: #{tpu_custom_call.1} parent=5 // pred_fallthru
        _
      %p863 = scmp.le.s32.totalorder 2, %s22
      // Predicated region
      $region49: #{tpu_custom_call.1} parent=5 // pred_check
        %p864 = pneg %p863
      $region50: #{tpu_custom_call.1} parent=5 // pred_check_branch
        %866 = sbr.rel (%p864) target = $region52
      $region51: #{tpu_custom_call.1} parent=5 // pred_region
        %s867 = ssub.s32 %s22, 2
        // Predicated region
        $region53: #{tpu_custom_call.1} parent=51 // pred_check
          %p868 = pneg %p117
        $region54: #{tpu_custom_call.1} parent=51 // pred_check_branch
          %870 = sbr.rel (%p868) target = $region56
        $region55: #{tpu_custom_call.1} parent=51 // pred_region
          %s871 = sand.u32 %s102, 1
          %s872 = scalar_lea.sflag [#allocation4], %s871
          %s873 = sand.u32 %s102, 1
          %s874 = scalar_lea.vmem [#allocation7], %s873
          %876 = dma.done %s872, 16
        $region56: #{tpu_custom_call.1} parent=51 // pred_fallthru
          _
        // Predicated region
        $region57: #{tpu_custom_call.1} parent=51 // pred_check
          %p877 = pneg %p143
        $region58: #{tpu_custom_call.1} parent=51 // pred_check_branch
          %879 = sbr.rel (%p877) target = $region60
        $region59: #{tpu_custom_call.1} parent=51 // pred_region
          %s880 = sand.u32 %s128, 1
          %s881 = scalar_lea.sflag [#allocation9], %s880
          %s882 = sand.u32 %s128, 1
          %s883 = scalar_lea.vmem [#allocation8], %s882
          %885 = dma.done %s881, 16
        $region60: #{tpu_custom_call.1} parent=51 // pred_fallthru
          _
      $region52: #{tpu_custom_call.1} parent=5 // pred_fallthru
        _
    $region6: #{tpu_custom_call.1} parent=1 // loop_footer
      %s26 = sadd.s32 1, %s22
    $region7: #{tpu_custom_call.1} parent=1 // loop_footer_branch
      %21 = sbr.rel target = $region3
    $region8: #{tpu_custom_call.1} parent=1 // loop_exit
      _
    %886 = vsyncpa [#allocation3], 1
    %s887 = scalar_lea.sflag [#allocation3], 1
    %888 = vsyncpa %s887, 1
    %889 = vsyncpa [#allocation6], 1
    %s890 = scalar_lea.sflag [#allocation6], 1
    %891 = vsyncpa %s890, 1
    %892 = vsyncpa [#allocation4], 1
    %s893 = scalar_lea.sflag [#allocation4], 1
    %894 = vsyncpa %s893, 1
    %895 = vsyncpa [#allocation9], 1
    %s896 = scalar_lea.sflag [#allocation9], 1
    %897 = vsyncpa %s896, 1

</llo_original>
